<compile_context>
chip_gen: v6e
topology: v6e:2x2x1
jax: 0.10.0
libtpu: 0.0.40
codegen_flags: <defaults>
</compile_context>

<pallas_src>
import functools

import jax
import jax.numpy as jnp
from jax.experimental import pallas as pl
from jax.experimental.pallas import tpu as pltpu


def _transform_net_kernel(x_ref, w1_ref, w2_ref, w3_ref,
                          wf1_ref, wf2_ref, wf3_ref, b_ref, out_ref,
                          *, batch_size: int, num_points: int):
    """x_ref: (B*N, K) bf16 point-major rows.  w*_ref: (in, out) bf16.
    b_ref: (6, max_dim) f32 bias slab (row i = bias of layer i, lane-aligned;
    the fc3 row already contains the flattened identity).  out_ref: (B, K*K) f32.
    """
    e16 = w1_ref.shape[1]
    e8 = w2_ref.shape[1]
    e = w3_ref.shape[1]
    e2 = wf1_ref.shape[1]
    e4 = wf2_ref.shape[1]
    kk = wf3_ref.shape[1]

    # conv1/conv2/conv3 (kernel_size=1) == per-point channel matmuls over all
    # B*N rows at once; bf16 MXU inputs, f32 accumulation, f32 bias + ReLU.
    h = jnp.dot(x_ref[...], w1_ref[...], preferred_element_type=jnp.float32)
    h = jnp.maximum(h + b_ref[0:1, :e16], 0.0)
    h = jnp.dot(h.astype(jnp.bfloat16), w2_ref[...],
                preferred_element_type=jnp.float32)
    h = jnp.maximum(h + b_ref[1:2, :e8], 0.0)
    h = jnp.dot(h.astype(jnp.bfloat16), w3_ref[...],
                preferred_element_type=jnp.float32)
    h = jnp.maximum(h + b_ref[2:3, :e], 0.0)              # (B*N, E) f32

    # Global max pooling over the point dimension, per batch element
    # (static row slices -> plain 2-D sublane reductions, unrolled over the
    # small batch dimension, then stacked into a (B, E) matrix).
    pooled = jnp.concatenate(
        [jnp.max(h[b * num_points:(b + 1) * num_points, :], axis=0,
                 keepdims=True)
         for b in range(batch_size)],
        axis=0)                                            # (B, E)

    # FC head, batched over B (one matmul with M=B instead of B with M=1).
    f = jnp.dot(pooled.astype(jnp.bfloat16), wf1_ref[...],
                preferred_element_type=jnp.float32)
    f = jnp.maximum(f + b_ref[3:4, :e2], 0.0)
    f = jnp.dot(f.astype(jnp.bfloat16), wf2_ref[...],
                preferred_element_type=jnp.float32)
    f = jnp.maximum(f + b_ref[4:5, :e4], 0.0)
    f = jnp.dot(f.astype(jnp.bfloat16), wf3_ref[...],
                preferred_element_type=jnp.float32)

    # fc3 bias row already holds (bias + flattened identity).
    out_ref[...] = f + b_ref[5:6, :kk]                     # (B, K*K)


def make_params(num_features: int, embedding_dim: int, key):
    """Deterministic synthetic parameters, already transposed to (in, out)."""
    k = num_features
    e = embedding_dim
    dims = [
        (k, e // 16),        # conv1
        (e // 16, e // 8),   # conv2
        (e // 8, e),         # conv3
        (e, e // 2),         # fc1
        (e // 2, e // 4),    # fc2
        (e // 4, k * k),     # fc3
    ]
    params = []
    keys = jax.random.split(key, 2 * len(dims))
    for i, (din, dout) in enumerate(dims):
        w = 0.1 * jax.random.normal(keys[2 * i], (din, dout), dtype=jnp.float32)
        b = 0.05 * jax.random.normal(keys[2 * i + 1], (1, dout), dtype=jnp.float32)
        params.append((w, b))
    return params


def point_net_feature_transform(x_bkn, params, num_features: int):
    """x_bkn: (B, K, N) float32 (PyTorch Conv1d layout).  Returns (B, K, K)."""
    B, K, N = x_bkn.shape
    assert K == num_features
    KK = K * K

    (w1, b1), (w2, b2), (w3, b3), (wf1, bf1), (wf2, bf2), (wf3, bf3) = params
    E16, E8, E = w1.shape[1], w2.shape[1], w3.shape[1]
    E2, E4 = wf1.shape[1], wf2.shape[1]

    # Row-collapse: (B, K, N) -> (B*N, K) point-major rows (single XLA
    # transpose in the wrapper; the kernel then sees only dense 2-D matmuls).
    x_rows = (jnp.transpose(x_bkn, (0, 2, 1))
              .reshape(B * N, K)
              .astype(jnp.bfloat16))

    # Pack all biases into one lane-aligned slab and fold the flattened
    # identity into the fc3 bias (drops `ident` as a kernel input).
    dmax = max(E, KK)
    ident = jnp.eye(K, dtype=jnp.float32).reshape(KK)
    rows = [(b1[0], E16), (b2[0], E8), (b3[0], E),
            (bf1[0], E2), (bf2[0], E4), (bf3[0] + ident, KK)]
    b_all = jnp.zeros((6, dmax), dtype=jnp.float32)
    for i, (vec, width) in enumerate(rows):
        b_all = b_all.at[i, :width].set(vec)

    as_bf16 = lambda w: w.astype(jnp.bfloat16)
    vmem = lambda: pl.BlockSpec(memory_space=pltpu.MemorySpace.VMEM)

    kernel = functools.partial(_transform_net_kernel,
                               batch_size=B, num_points=N)

    # Single invocation, no grid: everything fits comfortably in VMEM at these
    # shapes, so there is no per-step grid overhead and no M=1 MXU pushes.
    # TODO(synk): for production N/E (N ~ thousands, E=1024) add an N-tiled
    # "arbitrary" grid axis with a running-max VMEM accumulator (plus a
    # parallel batch split for the two v7x TensorCores) and set
    # vmem_limit_bytes explicitly.
    out = pl.pallas_call(
        kernel,
        out_shape=jax.ShapeDtypeStruct((B, KK), jnp.float32),
        in_specs=[vmem() for _ in range(8)],
        out_specs=vmem(),
    )(x_rows, as_bf16(w1), as_bf16(w2), as_bf16(w3),
      as_bf16(wf1), as_bf16(wf2), as_bf16(wf3), b_all)

    return out.reshape(B, K, K)


def _reference(x_bkn, params, num_features):
    """Plain-JAX f32 reference of the module's forward pass (sanity check)."""
    (w1, b1), (w2, b2), (w3, b3), (wf1, bf1), (wf2, bf2), (wf3, bf3) = params
    x = jnp.transpose(x_bkn, (0, 2, 1))                    # (B, N, K)
    h = jax.nn.relu(x @ w1 + b1)
    h = jax.nn.relu(h @ w2 + b2)
    h = jax.nn.relu(h @ w3 + b3)
    pooled = jnp.max(h, axis=1)                            # (B, E)
    f = jax.nn.relu(pooled @ wf1 + bf1[0])
    f = jax.nn.relu(f @ wf2 + bf2[0])
    f = f @ wf3 + bf3[0]
    f = f + jnp.eye(num_features).reshape(1, -1)
    return f.reshape(-1, num_features, num_features)


if __name__ == "__main__":
    # Small shapes consistent with the module: B=2, K(num_features)=4,
    # N(num_points)=16, embedding_dim=64.
    B, K, N, E = 2, 4, 16, 64

    key = jax.random.PRNGKey(0)
    k_x, k_p = jax.random.split(key)
    x = jax.random.normal(k_x, (B, K, N), dtype=jnp.float32)   # PyTorch (B, K, N)
    params = make_params(K, E, k_p)

    # TODO(synk): batch-norm and masked-pooling branches of the module are not
    # exercised in this config (use_batch_norm=False, use_masking=False).
    out = jax.block_until_ready(point_net_feature_transform(x, params, K))

    ref = _reference(x, params, K)
    assert out.shape == (B, K, K)
    # bf16 MXU inputs (f32 accumulation) -> loosened tolerance vs f32 reference.
    assert jnp.allclose(out, ref, atol=2e-2, rtol=2e-2)
    print("KERNEL_OK")
</pallas_src>

<mosaic_0001>
module attributes {stable_mosaic.version = 11 : i64} {
  func.func @_transform_net_kernel(%arg0: memref<32x4xbf16, #tpu.memory_space<vmem>>, %arg1: memref<4x4xbf16, #tpu.memory_space<vmem>>, %arg2: memref<4x8xbf16, #tpu.memory_space<vmem>>, %arg3: memref<8x64xbf16, #tpu.memory_space<vmem>>, %arg4: memref<64x32xbf16, #tpu.memory_space<vmem>>, %arg5: memref<32x16xbf16, #tpu.memory_space<vmem>>, %arg6: memref<16x16xbf16, #tpu.memory_space<vmem>>, %arg7: memref<6x64xf32, #tpu.memory_space<vmem>>, %arg8: memref<2x16xf32, #tpu.memory_space<vmem>>) attributes {dimension_semantics = [], scalar_prefetch = 0 : i64, scratch_operands = 0 : i64, tpu.core_type = #tpu.core_type<tc>} {
    %c0 = arith.constant 0 : index
    %c0_0 = arith.constant 0 : index
    %0 = vector.load %arg0[%c0, %c0_0] : memref<32x4xbf16, #tpu.memory_space<vmem>>, vector<32x4xbf16>
    %c0_1 = arith.constant 0 : index
    %c0_2 = arith.constant 0 : index
    %1 = vector.load %arg1[%c0_1, %c0_2] : memref<4x4xbf16, #tpu.memory_space<vmem>>, vector<4x4xbf16>
    %cst = arith.constant dense<0.000000e+00> : vector<32x4xf32>
    %2 = tpu.matmul %0, %1, %cst {dimension_numbers = #tpu.dot_dimension_numbers<[1], [0], [0], [1], [0, 0, 1, 1], [], []>} : vector<32x4xbf16>, vector<4x4xbf16>, vector<32x4xf32> -> vector<32x4xf32>
    %c0_3 = arith.constant 0 : index
    %c0_4 = arith.constant 0 : index
    %3 = vector.load %arg7[%c0_3, %c0_4] : memref<6x64xf32, #tpu.memory_space<vmem>>, vector<1x4xf32>
    %4 = vector.broadcast %3 : vector<1x4xf32> to vector<32x4xf32>
    %5 = arith.addf %2, %4 : vector<32x4xf32>
    %cst_5 = arith.constant 0.000000e+00 : f32
    %6 = vector.broadcast %cst_5 : f32 to vector<32x4xf32>
    %7 = arith.maximumf %5, %6 : vector<32x4xf32>
    %8 = arith.truncf %7 : vector<32x4xf32> to vector<32x4xbf16>
    %c0_6 = arith.constant 0 : index
    %c0_7 = arith.constant 0 : index
    %9 = vector.load %arg2[%c0_6, %c0_7] : memref<4x8xbf16, #tpu.memory_space<vmem>>, vector<4x8xbf16>
    %cst_8 = arith.constant dense<0.000000e+00> : vector<32x8xf32>
    %10 = tpu.matmul %8, %9, %cst_8 {dimension_numbers = #tpu.dot_dimension_numbers<[1], [0], [0], [1], [0, 0, 1, 1], [], []>} : vector<32x4xbf16>, vector<4x8xbf16>, vector<32x8xf32> -> vector<32x8xf32>
    %c1 = arith.constant 1 : index
    %c0_9 = arith.constant 0 : index
    %11 = vector.load %arg7[%c1, %c0_9] : memref<6x64xf32, #tpu.memory_space<vmem>>, vector<1x8xf32>
    %12 = vector.broadcast %11 : vector<1x8xf32> to vector<32x8xf32>
    %13 = arith.addf %10, %12 : vector<32x8xf32>
    %cst_10 = arith.constant 0.000000e+00 : f32
    %14 = vector.broadcast %cst_10 : f32 to vector<32x8xf32>
    %15 = arith.maximumf %13, %14 : vector<32x8xf32>
    %16 = arith.truncf %15 : vector<32x8xf32> to vector<32x8xbf16>
    %c0_11 = arith.constant 0 : index
    %c0_12 = arith.constant 0 : index
    %17 = vector.load %arg3[%c0_11, %c0_12] : memref<8x64xbf16, #tpu.memory_space<vmem>>, vector<8x64xbf16>
    %cst_13 = arith.constant dense<0.000000e+00> : vector<32x64xf32>
    %18 = tpu.matmul %16, %17, %cst_13 {dimension_numbers = #tpu.dot_dimension_numbers<[1], [0], [0], [1], [0, 0, 1, 1], [], []>} : vector<32x8xbf16>, vector<8x64xbf16>, vector<32x64xf32> -> vector<32x64xf32>
    %c2 = arith.constant 2 : index
    %c0_14 = arith.constant 0 : index
    %19 = vector.load %arg7[%c2, %c0_14] : memref<6x64xf32, #tpu.memory_space<vmem>>, vector<1x64xf32>
    %20 = vector.broadcast %19 : vector<1x64xf32> to vector<32x64xf32>
    %21 = arith.addf %18, %20 : vector<32x64xf32>
    %cst_15 = arith.constant 0.000000e+00 : f32
    %22 = vector.broadcast %cst_15 : f32 to vector<32x64xf32>
    %23 = arith.maximumf %21, %22 : vector<32x64xf32>
    %24 = vector.extract_strided_slice %23 {offsets = [0, 0], sizes = [16, 64], strides = [1, 1]} : vector<32x64xf32> to vector<16x64xf32>
    %cst_16 = arith.constant dense<0xFF800000> : vector<64xf32>
    %25 = vector.multi_reduction <maximumf>, %24, %cst_16 [0] : vector<16x64xf32> to vector<64xf32>
    %26 = vector.shape_cast %25 : vector<64xf32> to vector<1x64xf32>
    %27 = vector.extract_strided_slice %23 {offsets = [16, 0], sizes = [16, 64], strides = [1, 1]} : vector<32x64xf32> to vector<16x64xf32>
    %cst_17 = arith.constant dense<0xFF800000> : vector<64xf32>
    %28 = vector.multi_reduction <maximumf>, %27, %cst_17 [0] : vector<16x64xf32> to vector<64xf32>
    %29 = vector.shape_cast %28 : vector<64xf32> to vector<1x64xf32>
    %30 = tpu.concatenate %26, %29 in 0 : vector<1x64xf32>, vector<1x64xf32> -> vector<2x64xf32>
    %31 = arith.truncf %30 : vector<2x64xf32> to vector<2x64xbf16>
    %c0_18 = arith.constant 0 : index
    %c0_19 = arith.constant 0 : index
    %32 = vector.load %arg4[%c0_18, %c0_19] : memref<64x32xbf16, #tpu.memory_space<vmem>>, vector<64x32xbf16>
    %cst_20 = arith.constant dense<0.000000e+00> : vector<2x32xf32>
    %33 = tpu.matmul %31, %32, %cst_20 {dimension_numbers = #tpu.dot_dimension_numbers<[1], [0], [0], [1], [0, 0, 1, 1], [], []>} : vector<2x64xbf16>, vector<64x32xbf16>, vector<2x32xf32> -> vector<2x32xf32>
    %c3 = arith.constant 3 : index
    %c0_21 = arith.constant 0 : index
    %34 = vector.load %arg7[%c3, %c0_21] : memref<6x64xf32, #tpu.memory_space<vmem>>, vector<1x32xf32>
    %35 = vector.broadcast %34 : vector<1x32xf32> to vector<2x32xf32>
    %36 = arith.addf %33, %35 : vector<2x32xf32>
    %cst_22 = arith.constant 0.000000e+00 : f32
    %37 = vector.broadcast %cst_22 : f32 to vector<2x32xf32>
    %38 = arith.maximumf %36, %37 : vector<2x32xf32>
    %39 = arith.truncf %38 : vector<2x32xf32> to vector<2x32xbf16>
    %c0_23 = arith.constant 0 : index
    %c0_24 = arith.constant 0 : index
    %40 = vector.load %arg5[%c0_23, %c0_24] : memref<32x16xbf16, #tpu.memory_space<vmem>>, vector<32x16xbf16>
    %cst_25 = arith.constant dense<0.000000e+00> : vector<2x16xf32>
    %41 = tpu.matmul %39, %40, %cst_25 {dimension_numbers = #tpu.dot_dimension_numbers<[1], [0], [0], [1], [0, 0, 1, 1], [], []>} : vector<2x32xbf16>, vector<32x16xbf16>, vector<2x16xf32> -> vector<2x16xf32>
    %c4 = arith.constant 4 : index
    %c0_26 = arith.constant 0 : index
    %42 = vector.load %arg7[%c4, %c0_26] : memref<6x64xf32, #tpu.memory_space<vmem>>, vector<1x16xf32>
    %43 = vector.broadcast %42 : vector<1x16xf32> to vector<2x16xf32>
    %44 = arith.addf %41, %43 : vector<2x16xf32>
    %cst_27 = arith.constant 0.000000e+00 : f32
    %45 = vector.broadcast %cst_27 : f32 to vector<2x16xf32>
    %46 = arith.maximumf %44, %45 : vector<2x16xf32>
    %47 = arith.truncf %46 : vector<2x16xf32> to vector<2x16xbf16>
    %c0_28 = arith.constant 0 : index
    %c0_29 = arith.constant 0 : index
    %48 = vector.load %arg6[%c0_28, %c0_29] : memref<16x16xbf16, #tpu.memory_space<vmem>>, vector<16x16xbf16>
    %cst_30 = arith.constant dense<0.000000e+00> : vector<2x16xf32>
    %49 = tpu.matmul %47, %48, %cst_30 {dimension_numbers = #tpu.dot_dimension_numbers<[1], [0], [0], [1], [0, 0, 1, 1], [], []>} : vector<2x16xbf16>, vector<16x16xbf16>, vector<2x16xf32> -> vector<2x16xf32>
    %c5 = arith.constant 5 : index
    %c0_31 = arith.constant 0 : index
    %50 = vector.load %arg7[%c5, %c0_31] : memref<6x64xf32, #tpu.memory_space<vmem>>, vector<1x16xf32>
    %51 = vector.broadcast %50 : vector<1x16xf32> to vector<2x16xf32>
    %52 = arith.addf %49, %51 : vector<2x16xf32>
    %c0_32 = arith.constant 0 : index
    %c0_33 = arith.constant 0 : index
    %53 = vector.load %arg8[%c0_32, %c0_33] : memref<2x16xf32, #tpu.memory_space<vmem>>, vector<2x16xf32>
    tpu.vector_store %arg8[%c0_32, %c0_33], %52 {strides = array<i32>} : memref<2x16xf32, #tpu.memory_space<vmem>>, vector<2x16xf32>,
    return
  }
}

</mosaic_0001>

<llo_original>
// kernel: tpu_custom_call.1
$region0: #{tpu_custom_call.1}
  #allocation0 [shape = 'u32[]', space=smem, size = 0x4, offset = 0x4, fixed_abs, tag = 'smem constant byte address 0x4 - core index']
  #allocation1 [shape = 'u32[144,128]{1,0:T(1,128)}', space=vmem, size = 0x12000, scoped, tag = 'internal scratch']
  %s0 = inlined_call_operand.vmem [shape: bf16[32,4], index: 0, kind: input, shape index: {}]
  %s1 = inlined_call_operand.vmem [shape: bf16[4,4], index: 1, kind: input, shape index: {}]
  %s2 = inlined_call_operand.vmem [shape: bf16[4,8], index: 2, kind: input, shape index: {}]
  %s3 = inlined_call_operand.vmem [shape: bf16[8,64], index: 3, kind: input, shape index: {}]
  %s4 = inlined_call_operand.vmem [shape: bf16[64,32], index: 4, kind: input, shape index: {}]
  %s5 = inlined_call_operand.vmem [shape: bf16[32,16], index: 5, kind: input, shape index: {}]
  %s6 = inlined_call_operand.vmem [shape: bf16[16,16], index: 6, kind: input, shape index: {}]
  %s7 = inlined_call_operand.vmem [shape: f32[6,64], index: 7, kind: input, shape index: {}]
  %s8 = inlined_call_operand.hbm [shape: f32[2,16], index: 8, kind: output, shape index: {}]
  %s9 = sld [smem:[#allocation0]]
  $region42: #{tpu_custom_call.1} parent=0
    _
  %s11 = ssub.s32 1, %s9
  %s12 = scalar_select 0, %s11, %s9
  $region1: #{tpu_custom_call.1} parent=0
    #allocation2 [shape = 'u8[1024]{0}', space=vmem, size = 0x400, scoped, tag = 'output window, operand 0, single buffered']
    #allocation3 [shape = 's32[1]{0}', space=sflag, size = 0x4, scoped, tag = 'scoped memory for tpu_custom_call.1']
    %13 = vsyncpa [#allocation3], 0
    // Predicated region
    $region2: #{tpu_custom_call.1} parent=1 // pred_check
      _
    $region3: #{tpu_custom_call.1} parent=1 // pred_check_branch
      %15 = sbr.rel (0) target = $region5
    $region4: #{tpu_custom_call.1} parent=1 // pred_region
      _
    $region5: #{tpu_custom_call.1} parent=1 // pred_fallthru
      _
    // Predicated region
    $region6: #{tpu_custom_call.1} parent=1 // pred_check
      _
    $region7: #{tpu_custom_call.1} parent=1 // pred_check_branch
      %17 = sbr.rel (0) target = $region9
    $region8: #{tpu_custom_call.1} parent=1 // pred_region
      _
    $region9: #{tpu_custom_call.1} parent=1 // pred_fallthru
      _
    // Predicated region
    $region10: #{tpu_custom_call.1} parent=1 // pred_check
      _
    $region11: #{tpu_custom_call.1} parent=1 // pred_check_branch
      %19 = sbr.rel (0) target = $region13
    $region12: #{tpu_custom_call.1} parent=1 // pred_region
      _
    $region13: #{tpu_custom_call.1} parent=1 // pred_fallthru
      _
    // Predicated region
    $region14: #{tpu_custom_call.1} parent=1 // pred_check
      _
    $region15: #{tpu_custom_call.1} parent=1 // pred_check_branch
      %21 = sbr.rel (0) target = $region17
    $region16: #{tpu_custom_call.1} parent=1 // pred_region
      _
    $region17: #{tpu_custom_call.1} parent=1 // pred_fallthru
      _
    // Predicated region
    $region18: #{tpu_custom_call.1} parent=1 // pred_check
      _
    $region19: #{tpu_custom_call.1} parent=1 // pred_check_branch
      %23 = sbr.rel (0) target = $region21
    $region20: #{tpu_custom_call.1} parent=1 // pred_region
      _
    $region21: #{tpu_custom_call.1} parent=1 // pred_fallthru
      _
    // Predicated region
    $region22: #{tpu_custom_call.1} parent=1 // pred_check
      _
    $region23: #{tpu_custom_call.1} parent=1 // pred_check_branch
      %25 = sbr.rel (0) target = $region25
    $region24: #{tpu_custom_call.1} parent=1 // pred_region
      _
    $region25: #{tpu_custom_call.1} parent=1 // pred_fallthru
      _
    // Predicated region
    $region26: #{tpu_custom_call.1} parent=1 // pred_check
      _
    $region27: #{tpu_custom_call.1} parent=1 // pred_check_branch
      %27 = sbr.rel (0) target = $region29
    $region28: #{tpu_custom_call.1} parent=1 // pred_region
      _
    $region29: #{tpu_custom_call.1} parent=1 // pred_fallthru
      _
    // Predicated region
    $region30: #{tpu_custom_call.1} parent=1 // pred_check
      _
    $region31: #{tpu_custom_call.1} parent=1 // pred_check_branch
      %29 = sbr.rel (0) target = $region33
    $region32: #{tpu_custom_call.1} parent=1 // pred_region
      _
    $region33: #{tpu_custom_call.1} parent=1 // pred_fallthru
      _
    %v31 = vld [vmem:[%s0] sm:$0xf]
    %v32 = vld [vmem:[%s0 + $0x4] sm:$0xf]
    %v33 = vld [vmem:[%s0 + $0x8] sm:$0xf]
    %v34 = vld [vmem:[%s0 + $0xc] sm:$0xf]
    %v35 = vld [vmem:[%s1] sm:$0x3]
    %v36 = vld [vmem:[%s7] sm:$0x1]
    %v37 = vlaneseq
    %v38 = vshrl.u32 %v37, 7
    %v39 = vsub.s32 0, %v38
    %v40 = vrot.slane %v36, %v39
    %v45 = vunpack.c.l.b16 %v31
    %v46 = vunpack.c.l.b16 %v32
    %v47 = vunpack.c.l.b16 %v33
    %v48 = vunpack.c.l.b16 %v34
    %v49 = vpack.c.b16 %v46, %v45
    %v50 = vpack.c.b16 %v48, %v47
    %vm51 = vcmask 31744
    %v53 = vsel %vm51, %v49, 0
    %v56 = vsel %vm51, %v50, 0
    %vm58 = vcmask 1041408
    %v60 = vsel %vm58, %v35, 0
    %62 = vmatprep.subr.bf16.mxu0 0
    %63 = vmatpush1.bf16.msra.mxu0 0
    %64 = vmatprep.subr.bf16.mxu0 0
    %65 = vmatpush1.bf16.msra.mxu0 0
    %66 = vmatprep.subr.bf16.mxu0 0
    %67 = vmatpush1.bf16.msra.mxu0 0
    %68 = vmatprep.subr.bf16.mxu0 0
    %69 = vmatpush1.bf16.msra.mxu0 0
    %70 = vmatprep.subr.bf16.mxu0 0
    %71 = vmatpush1.bf16.msra.mxu0 0
    %72 = vmatprep.subr.bf16.mxu0 0
    %73 = vmatpush1.bf16.msra.mxu0 0
    %74 = vmatprep.subr.bf16.mxu0 0
    %75 = vmatpush1.bf16.msra.mxu0 0
    %76 = vmatprep.subr.bf16.mxu0 0
    %77 = vmatpush1.bf16.msra.mxu0 %v60
    %78 = vmatprep.subr.bf16.mxu0 0
    %79 = vmatpush2.bf16.msra.mxu0 0
    %80 = vmatprep.subr.bf16.mxu0 0
    %81 = vmatpush2.bf16.msra.mxu0 0
    %82 = vmatprep.subr.bf16.mxu0 0
    %83 = vmatpush2.bf16.msra.mxu0 0
    %84 = vmatprep.subr.bf16.mxu0 0
    %85 = vmatpush2.bf16.msra.mxu0 0
    %86 = vmatprep.subr.bf16.mxu0 0
    %87 = vmatpush2.bf16.msra.mxu0 0
    %88 = vmatprep.subr.bf16.mxu0 0
    %89 = vmatpush2.bf16.msra.mxu0 0
    %90 = vmatprep.subr.bf16.mxu0 0
    %91 = vmatpush2.bf16.msra.mxu0 0
    %92 = vmatprep.subr.bf16.mxu0 0
    %93 = vmatpush2.bf16.msra.mxu0 0
    %94 = vmatprep.mubr.bf16.mxu0 0
    %95 = vmatmul.mubr.bf16.gmra.mxu0 %v53
    %v96 = vpop.f32.mrf.mxu0
    %v97 = vadd.f32 %v40, %v96
    %v98 = vpop.f32.mrf.mxu0
    %v99 = vpop.f32.mrf.mxu0
    %v100 = vadd.f32 %v40, %v99
    %v101 = vpop.f32.mrf.mxu0
    %102 = vmatprep.mubr.bf16.mxu0 0
    %103 = vmatmul.mubr.bf16.gmra.mxu0 %v56
    %v104 = vpop.f32.mrf.mxu0
    %v105 = vadd.f32 %v40, %v104
    %v106 = vpop.f32.mrf.mxu0
    %v107 = vpop.f32.mrf.mxu0
    %v108 = vadd.f32 %v40, %v107
    %v109 = vpop.f32.mrf.mxu0
    %110 = vdwg.mxu0
    %v111 = vmax.f32 %v97, 0.0
    %v112 = vmax.f32 %v100, 0.0
    %v113 = vmax.f32 %v105, 0.0
    %v114 = vmax.f32 %v108, 0.0
    %v115 = vpack.c.bf16 %v112, %v111
    %v116 = vpack.c.bf16 %v114, %v113
    %v117 = vld [vmem:[%s2] sm:$0x3]
    %v118 = vld [vmem:[%s7 + $0x1] sm:$0x1]
    %v119 = vlaneseq
    %v120 = vshrl.u32 %v119, 7
    %v121 = vsub.s32 0, %v120
    %v122 = vrot.slane %v118, %v121
    %v124 = vsel %vm51, %v115, 0
    %v127 = vsel %vm51, %v116, 0
    %v130 = vsel %vm58, %v117, 0
    %132 = vmatprep.subr.bf16.mxu0 0
    %133 = vmatpush1.bf16.msra.mxu0 0
    %134 = vmatprep.subr.bf16.mxu0 0
    %135 = vmatpush1.bf16.msra.mxu0 0
    %136 = vmatprep.subr.bf16.mxu0 0
    %137 = vmatpush1.bf16.msra.mxu0 0
    %138 = vmatprep.subr.bf16.mxu0 0
    %139 = vmatpush1.bf16.msra.mxu0 0
    %140 = vmatprep.subr.bf16.mxu0 0
    %141 = vmatpush1.bf16.msra.mxu0 0
    %142 = vmatprep.subr.bf16.mxu0 0
    %143 = vmatpush1.bf16.msra.mxu0 0
    %144 = vmatprep.subr.bf16.mxu0 0
    %145 = vmatpush1.bf16.msra.mxu0 0
    %146 = vmatprep.subr.bf16.mxu0 0
    %147 = vmatpush1.bf16.msra.mxu0 %v130
    %148 = vmatprep.subr.bf16.mxu0 0
    %149 = vmatpush2.bf16.msra.mxu0 0
    %150 = vmatprep.subr.bf16.mxu0 0
    %151 = vmatpush2.bf16.msra.mxu0 0
    %152 = vmatprep.subr.bf16.mxu0 0
    %153 = vmatpush2.bf16.msra.mxu0 0
    %154 = vmatprep.subr.bf16.mxu0 0
    %155 = vmatpush2.bf16.msra.mxu0 0
    %156 = vmatprep.subr.bf16.mxu0 0
    %157 = vmatpush2.bf16.msra.mxu0 0
    %158 = vmatprep.subr.bf16.mxu0 0
    %159 = vmatpush2.bf16.msra.mxu0 0
    %160 = vmatprep.subr.bf16.mxu0 0
    %161 = vmatpush2.bf16.msra.mxu0 0
    %162 = vmatprep.subr.bf16.mxu0 0
    %163 = vmatpush2.bf16.msra.mxu0 0
    %164 = vmatprep.mubr.bf16.mxu0 0
    %165 = vmatmul.mubr.bf16.gmra.mxu0 %v124
    %v166 = vpop.f32.mrf.mxu0
    %v167 = vadd.f32 %v122, %v166
    %v168 = vpop.f32.mrf.mxu0
    %v169 = vpop.f32.mrf.mxu0
    %v170 = vadd.f32 %v122, %v169
    %v171 = vpop.f32.mrf.mxu0
    %172 = vmatprep.mubr.bf16.mxu0 0
    %173 = vmatmul.mubr.bf16.gmra.mxu0 %v127
    %v174 = vpop.f32.mrf.mxu0
    %v175 = vadd.f32 %v122, %v174
    %v176 = vpop.f32.mrf.mxu0
    %v177 = vpop.f32.mrf.mxu0
    %v178 = vadd.f32 %v122, %v177
    %v179 = vpop.f32.mrf.mxu0
    %180 = vdwg.mxu0
    %v181 = vmax.f32 %v167, 0.0
    %v182 = vmax.f32 %v170, 0.0
    %v183 = vmax.f32 %v175, 0.0
    %v184 = vmax.f32 %v178, 0.0
    %v185 = vpack.c.bf16 %v182, %v181
    %v186 = vpack.c.bf16 %v184, %v183
    %v187 = vld [vmem:[%s3] sm:$0xf]
    %v188 = vld [vmem:[%s7 + $0x2] sm:$0x1]
    %v189 = vlaneseq
    %v190 = vshrl.u32 %v189, 7
    %v191 = vsub.s32 0, %v190
    %v192 = vrot.slane %v188, %v191
    %vm193 = vcmask 64512
    %v195 = vsel %vm193, %v185, 0
    %v198 = vsel %vm193, %v186, 0
    %vm200 = vcmask 1043456
    %v202 = vsel %vm200, %v187, 0
    %204 = vmatprep.subr.bf16.mxu0 0
    %205 = vmatpush1.bf16.msra.mxu0 0
    %206 = vmatprep.subr.bf16.mxu0 0
    %207 = vmatpush1.bf16.msra.mxu0 0
    %208 = vmatprep.subr.bf16.mxu0 0
    %209 = vmatpush1.bf16.msra.mxu0 0
    %210 = vmatprep.subr.bf16.mxu0 0
    %211 = vmatpush1.bf16.msra.mxu0 0
    %212 = vmatprep.subr.bf16.mxu0 0
    %213 = vmatpush1.bf16.msra.mxu0 0
    %214 = vmatprep.subr.bf16.mxu0 0
    %215 = vmatpush1.bf16.msra.mxu0 0
    %216 = vmatprep.subr.bf16.mxu0 0
    %217 = vmatpush1.bf16.msra.mxu0 0
    %218 = vmatprep.subr.bf16.mxu0 0
    %219 = vmatpush1.bf16.msra.mxu0 %v202
    %220 = vmatprep.subr.bf16.mxu0 0
    %221 = vmatpush2.bf16.msra.mxu0 0
    %222 = vmatprep.subr.bf16.mxu0 0
    %223 = vmatpush2.bf16.msra.mxu0 0
    %224 = vmatprep.subr.bf16.mxu0 0
    %225 = vmatpush2.bf16.msra.mxu0 0
    %226 = vmatprep.subr.bf16.mxu0 0
    %227 = vmatpush2.bf16.msra.mxu0 0
    %228 = vmatprep.subr.bf16.mxu0 0
    %229 = vmatpush2.bf16.msra.mxu0 0
    %230 = vmatprep.subr.bf16.mxu0 0
    %231 = vmatpush2.bf16.msra.mxu0 0
    %232 = vmatprep.subr.bf16.mxu0 0
    %233 = vmatpush2.bf16.msra.mxu0 0
    %234 = vmatprep.subr.bf16.mxu0 0
    %235 = vmatpush2.bf16.msra.mxu0 0
    %236 = vmatprep.mubr.bf16.mxu0 0
    %237 = vmatmul.mubr.bf16.gmra.mxu0 %v195
    %v238 = vpop.f32.mrf.mxu0
    %v239 = vadd.f32 %v192, %v238
    %v240 = vpop.f32.mrf.mxu0
    %v241 = vpop.f32.mrf.mxu0
    %v242 = vadd.f32 %v192, %v241
    %v243 = vpop.f32.mrf.mxu0
    %244 = vmatprep.mubr.bf16.mxu0 0
    %245 = vmatmul.mubr.bf16.gmra.mxu0 %v198
    %v246 = vpop.f32.mrf.mxu0
    %v247 = vadd.f32 %v192, %v246
    %v248 = vpop.f32.mrf.mxu0
    %v249 = vpop.f32.mrf.mxu0
    %v250 = vadd.f32 %v192, %v249
    %v251 = vpop.f32.mrf.mxu0
    %252 = vdwg.mxu0
    %v253 = vmax.f32 %v239, 0.0
    %v254 = vmax.f32 %v242, 0.0
    %v255 = vmax.f32 %v247, 0.0
    %v256 = vmax.f32 %v250, 0.0
    %vm257 = vcmask 523264
    %v258 = vsel %vm257, %v253, -inf
    %v259 = vsel %vm257, %v254, -inf
    %v260 = vmax.f32 %v258, %v259
    %v261 = vrot.slane %v260, 4
    %v262 = vmax.f32 %v260, %v261
    %v263 = vrot.slane %v262, 2
    %v264 = vmax.f32 %v262, %v263
    %v265 = vrot.slane %v264, 1
    %v266 = vmax.f32 %v264, %v265
    %v267 = vsel %vm257, %v255, -inf
    %v268 = vsel %vm257, %v256, -inf
    %v269 = vmax.f32 %v267, %v268
    %v270 = vrot.slane %v269, 4
    %v271 = vmax.f32 %v269, %v270
    %v272 = vrot.slane %v271, 2
    %v273 = vmax.f32 %v271, %v272
    %v274 = vrot.slane %v273, 1
    %v275 = vmax.f32 %v273, %v274
    %vm276 = vcmask 1040384
    %v277 = vsel %vm276, %v266, %v275
    %v278 = vpack.c.bf16 %v277, %v277
    %v279 = vld [vmem:[%s4] sm:$0xf]
    %v280 = vld [vmem:[%s4 + $0x4] sm:$0xf]
    %v281 = vld [vmem:[%s4 + $0x8] sm:$0xf]
    %v282 = vld [vmem:[%s4 + $0xc] sm:$0xf]
    %v283 = vld [vmem:[%s4 + $0x10] sm:$0xf]
    %v284 = vld [vmem:[%s4 + $0x14] sm:$0xf]
    %v285 = vld [vmem:[%s4 + $0x18] sm:$0xf]
    %v286 = vld [vmem:[%s4 + $0x1c] sm:$0xf]
    %v287 = vld [vmem:[%s7 + $0x3] sm:$0x1]
    %v288 = vlaneseq
    %v289 = vshrl.u32 %v288, 7
    %v290 = vsub.s32 0, %v289
    %v291 = vrot.slane %v287, %v290
    %v300 = vunpack.c.l.b16 %v279
    %v301 = vunpack.c.l.b16 %v280
    %v302 = vunpack.c.l.b16 %v281
    %v303 = vunpack.c.l.b16 %v282
    %v304 = vunpack.c.l.b16 %v283
    %v305 = vunpack.c.l.b16 %v284
    %v306 = vunpack.c.l.b16 %v285
    %v307 = vunpack.c.l.b16 %v286
    %v308 = vpack.c.b16 %v301, %v300
    %v309 = vpack.c.b16 %v303, %v302
    %v310 = vpack.c.b16 %v305, %v304
    %v311 = vpack.c.b16 %v307, %v306
    %v317 = vsel %vm257, %v278, 0
    %319 = vmatprep.subr.bf16.mxu0 0
    %320 = vmatpush1.bf16.msra.mxu0 0
    %321 = vmatprep.subr.bf16.mxu0 0
    %322 = vmatpush1.bf16.msra.mxu0 0
    %323 = vmatprep.subr.bf16.mxu0 0
    %324 = vmatpush1.bf16.msra.mxu0 0
    %325 = vmatprep.subr.bf16.mxu0 0
    %326 = vmatpush1.bf16.msra.mxu0 0
    %327 = vmatprep.subr.bf16.mxu0 0
    %328 = vmatpush1.bf16.msra.mxu0 %v311
    %329 = vmatprep.subr.bf16.mxu0 0
    %330 = vmatpush1.bf16.msra.mxu0 %v310
    %331 = vmatprep.subr.bf16.mxu0 0
    %332 = vmatpush1.bf16.msra.mxu0 %v309
    %333 = vmatprep.subr.bf16.mxu0 0
    %334 = vmatpush1.bf16.msra.mxu0 %v308
    %335 = vmatprep.subr.bf16.mxu0 0
    %336 = vmatpush2.bf16.msra.mxu0 0
    %337 = vmatprep.subr.bf16.mxu0 0
    %338 = vmatpush2.bf16.msra.mxu0 0
    %339 = vmatprep.subr.bf16.mxu0 0
    %340 = vmatpush2.bf16.msra.mxu0 0
    %341 = vmatprep.subr.bf16.mxu0 0
    %342 = vmatpush2.bf16.msra.mxu0 0
    %343 = vmatprep.subr.bf16.mxu0 0
    %344 = vmatpush2.bf16.msra.mxu0 0
    %345 = vmatprep.subr.bf16.mxu0 0
    %346 = vmatpush2.bf16.msra.mxu0 0
    %347 = vmatprep.subr.bf16.mxu0 0
    %348 = vmatpush2.bf16.msra.mxu0 0
    %349 = vmatprep.subr.bf16.mxu0 0
    %350 = vmatpush2.bf16.msra.mxu0 0
    %351 = vmatprep.mubr.bf16.mxu0 0
    %352 = vmatmul.mubr.bf16.gmra.mxu0 %v317
    %v353 = vpop.f32.mrf.mxu0
    %v354 = vadd.f32 %v291, %v353
    %v355 = vpop.f32.mrf.mxu0
    %v356 = vpop.f32.mrf.mxu0
    %v357 = vpop.f32.mrf.mxu0
    %358 = vdwg.mxu0
    %v359 = vmax.f32 %v354, 0.0
    %v360 = vpack.c.bf16 %v359, %v359
    %v361 = vld [vmem:[%s5] sm:$0xf]
    %v362 = vld [vmem:[%s5 + $0x4] sm:$0xf]
    %v363 = vld [vmem:[%s5 + $0x8] sm:$0xf]
    %v364 = vld [vmem:[%s5 + $0xc] sm:$0xf]
    %v365 = vld [vmem:[%s7 + $0x4] sm:$0x1]
    %v366 = vlaneseq
    %v367 = vshrl.u32 %v366, 7
    %v368 = vsub.s32 0, %v367
    %v369 = vrot.slane %v365, %v368
    %v374 = vunpack.c.l.b16 %v361
    %v375 = vunpack.c.l.b16 %v362
    %v376 = vunpack.c.l.b16 %v363
    %v377 = vunpack.c.l.b16 %v364
    %v378 = vpack.c.b16 %v375, %v374
    %v379 = vpack.c.b16 %v377, %v376
    %vm382 = vcmask 261120
    %v384 = vsel %vm382, %v360, 0
    %386 = vmatprep.subr.bf16.mxu0 0
    %387 = vmatpush1.bf16.msra.mxu0 0
    %388 = vmatprep.subr.bf16.mxu0 0
    %389 = vmatpush1.bf16.msra.mxu0 0
    %390 = vmatprep.subr.bf16.mxu0 0
    %391 = vmatpush1.bf16.msra.mxu0 0
    %392 = vmatprep.subr.bf16.mxu0 0
    %393 = vmatpush1.bf16.msra.mxu0 0
    %394 = vmatprep.subr.bf16.mxu0 0
    %395 = vmatpush1.bf16.msra.mxu0 0
    %396 = vmatprep.subr.bf16.mxu0 0
    %397 = vmatpush1.bf16.msra.mxu0 0
    %398 = vmatprep.subr.bf16.mxu0 0
    %399 = vmatpush1.bf16.msra.mxu0 %v379
    %400 = vmatprep.subr.bf16.mxu0 0
    %401 = vmatpush1.bf16.msra.mxu0 %v378
    %402 = vmatprep.subr.bf16.mxu0 0
    %403 = vmatpush2.bf16.msra.mxu0 0
    %404 = vmatprep.subr.bf16.mxu0 0
    %405 = vmatpush2.bf16.msra.mxu0 0
    %406 = vmatprep.subr.bf16.mxu0 0
    %407 = vmatpush2.bf16.msra.mxu0 0
    %408 = vmatprep.subr.bf16.mxu0 0
    %409 = vmatpush2.bf16.msra.mxu0 0
    %410 = vmatprep.subr.bf16.mxu0 0
    %411 = vmatpush2.bf16.msra.mxu0 0
    %412 = vmatprep.subr.bf16.mxu0 0
    %413 = vmatpush2.bf16.msra.mxu0 0
    %414 = vmatprep.subr.bf16.mxu0 0
    %415 = vmatpush2.bf16.msra.mxu0 0
    %416 = vmatprep.subr.bf16.mxu0 0
    %417 = vmatpush2.bf16.msra.mxu0 0
    %418 = vmatprep.mubr.bf16.mxu0 0
    %419 = vmatmul.mubr.bf16.gmra.mxu0 %v384
    %v420 = vpop.f32.mrf.mxu0
    %v421 = vadd.f32 %v369, %v420
    %v422 = vpop.f32.mrf.mxu0
    %v423 = vpop.f32.mrf.mxu0
    %v424 = vpop.f32.mrf.mxu0
    %425 = vdwg.mxu0
    %v426 = vmax.f32 %v421, 0.0
    %v427 = vpack.c.bf16 %v426, %v426
    %v428 = vld [vmem:[%s6] sm:$0xf]
    %v429 = vld [vmem:[%s6 + $0x4] sm:$0xf]
    %v430 = vld [vmem:[%s7 + $0x5] sm:$0x1]
    %v431 = vlaneseq
    %v432 = vshrl.u32 %v431, 7
    %v433 = vsub.s32 0, %v432
    %v434 = vrot.slane %v430, %v433
    %v437 = vunpack.c.l.b16 %v428
    %v438 = vunpack.c.l.b16 %v429
    %v439 = vpack.c.b16 %v438, %v437
    %vm441 = vcmask 130048
    %v443 = vsel %vm441, %v427, 0
    %445 = vmatprep.subr.bf16.mxu0 0
    %446 = vmatpush1.bf16.msra.mxu0 0
    %447 = vmatprep.subr.bf16.mxu0 0
    %448 = vmatpush1.bf16.msra.mxu0 0
    %449 = vmatprep.subr.bf16.mxu0 0
    %450 = vmatpush1.bf16.msra.mxu0 0
    %451 = vmatprep.subr.bf16.mxu0 0
    %452 = vmatpush1.bf16.msra.mxu0 0
    %453 = vmatprep.subr.bf16.mxu0 0
    %454 = vmatpush1.bf16.msra.mxu0 0
    %455 = vmatprep.subr.bf16.mxu0 0
    %456 = vmatpush1.bf16.msra.mxu0 0
    %457 = vmatprep.subr.bf16.mxu0 0
    %458 = vmatpush1.bf16.msra.mxu0 0
    %459 = vmatprep.subr.bf16.mxu0 0
    %460 = vmatpush1.bf16.msra.mxu0 %v439
    %461 = vmatprep.subr.bf16.mxu0 0
    %462 = vmatpush2.bf16.msra.mxu0 0
    %463 = vmatprep.subr.bf16.mxu0 0
    %464 = vmatpush2.bf16.msra.mxu0 0
    %465 = vmatprep.subr.bf16.mxu0 0
    %466 = vmatpush2.bf16.msra.mxu0 0
    %467 = vmatprep.subr.bf16.mxu0 0
    %468 = vmatpush2.bf16.msra.mxu0 0
    %469 = vmatprep.subr.bf16.mxu0 0
    %470 = vmatpush2.bf16.msra.mxu0 0
    %471 = vmatprep.subr.bf16.mxu0 0
    %472 = vmatpush2.bf16.msra.mxu0 0
    %473 = vmatprep.subr.bf16.mxu0 0
    %474 = vmatpush2.bf16.msra.mxu0 0
    %475 = vmatprep.subr.bf16.mxu0 0
    %476 = vmatpush2.bf16.msra.mxu0 0
    %477 = vmatprep.mubr.bf16.mxu0 0
    %478 = vmatmul.mubr.bf16.gmra.mxu0 %v443
    %v479 = vpop.f32.mrf.mxu0
    %v480 = vadd.f32 %v434, %v479
    %v481 = vpop.f32.mrf.mxu0
    %v482 = vpop.f32.mrf.mxu0
    %v483 = vpop.f32.mrf.mxu0
    %484 = vdwg.mxu0
    %vm485 = vcmask 123904
    %486 = vst.msk [vmem:[#allocation2] sm:$0x3] %vm485, %v480
    // Predicated region
    $region34: #{tpu_custom_call.1} parent=1 // pred_check
      _
    $region35: #{tpu_custom_call.1} parent=1 // pred_check_branch
      %488 = sbr.rel (0) target = $region37
    $region36: #{tpu_custom_call.1} parent=1 // pred_region
      %s490 = ssub.s32 32, 32
      %491 = vsyncadd [#allocation3], %s490
      %s493 = sshll.u32 [#allocation2], 4
      %s494 = int_to_ptr.vmem [resolvable:$true] %s493
      %496 = dma.vmem_to_hbm [thread:$0]  %s494, 32, %s8, [#allocation3]
    $region37: #{tpu_custom_call.1} parent=1 // pred_fallthru
      _
    // Predicated region
    $region38: #{tpu_custom_call.1} parent=1 // pred_check
      _
    $region39: #{tpu_custom_call.1} parent=1 // pred_check_branch
      %498 = sbr.rel (0) target = $region41
    $region40: #{tpu_custom_call.1} parent=1 // pred_region
      %499 = dma.done [#allocation3], 32
    $region41: #{tpu_custom_call.1} parent=1 // pred_fallthru
      _
    %500 = vsyncpa [#allocation3], 1

</llo_original>
